<compile_context>
chip_gen: v5e
topology: v5e:2x2
jax: 0.10.0
libtpu: 0.0.40
codegen_flags: <defaults>
</compile_context>

<pallas_src>
import jax
import jax.numpy as jnp
from jax.experimental import pallas as pl
from jax.experimental.pallas import tpu as pltpu

EPS = 1e-5  # nn.LayerNorm default


def _expand_rearrange_ln_kernel(x_ref, w_ref, segr_ref, segb_ref, segbg_ref,
                                beta_ref, o_ref):
    """One (batch, row-tile, p1) grid step.

    x_ref:     (TH*W, dim)      tokens of TH image rows (batch dim squeezed), f32
    w_ref:     (4, dim, 4*dim)  full expand weight, p1-major, resident in VMEM
    segr_ref:  (4*dim, 4)       0/1 lane-group reduction matrix
    segb_ref:  (4, 4*dim)       0/1 lane-group broadcast matrix
    segbg_ref: (4, 4*dim)       broadcast matrix pre-scaled by LayerNorm gamma
    beta_ref:  (1, 4*dim)       LayerNorm beta, tiled over the 4 p2 groups
    o_ref:     (TH, W, 4*dim)   output rows for this (batch, row-tile, p1)
    """
    p1 = pl.program_id(2)

    x = x_ref[...]                                             # (TL, dim) f32
    dim = x.shape[-1]
    inv_dim = 1.0 / dim

    # Per-p1 weight slice from the resident weight (dynamic first-axis index).
    w = w_ref[p1]                                              # (dim, 4*dim)

    # 16x channel expansion for this p1 slice -- MXU, f32 accumulation.
    y = jnp.dot(x, w, preferred_element_type=jnp.float32)      # (TL, 4*dim)

    seg_r = segr_ref[...]                                      # (4*dim, 4)

    # Per-(token, p2) LayerNorm statistics via tiny MXU matmuls against 0/1
    # matrices: the (TL, 4*dim) tile stays lane-dense (no reshape to last-dim=dim).
    mean_g = jnp.dot(y, seg_r, preferred_element_type=jnp.float32) * inv_dim
    mean = jnp.dot(mean_g, segb_ref[...],
                   preferred_element_type=jnp.float32)         # (TL, 4*dim)
    yc = y - mean
    var_g = jnp.dot(yc * yc, seg_r,
                    preferred_element_type=jnp.float32) * inv_dim   # (TL, 4)
    rstd_g = jax.lax.rsqrt(var_g + EPS)                             # (TL, 4)
    # gamma folded into the broadcast matrix -> one fewer full-tile VPU multiply.
    scale = jnp.dot(rstd_g, segbg_ref[...],
                    preferred_element_type=jnp.float32)        # rstd*gamma, (TL, 4*dim)
    yn = yc * scale + beta_ref[...]                            # f32 epilogue

    # (TH*W, 4*dim) -> (TH, W, 4*dim): sublane split only.  Single cast at the
    # lane-dense store (last dim 4*dim >= 128, full width -> unmasked vst).
    o_ref[...] = yn.reshape(o_ref.shape).astype(o_ref.dtype)


def _vmem_capacity_bytes():
    """Trace-time VMEM capacity; safe (v7x-sized) fallback if the query fails."""
    try:
        return int(pltpu.get_tpu_info().vmem_capacity_bytes)
    except Exception:  # pragma: no cover - conservative fallback
        return 64 * 1024 * 1024


def _choose_row_tile(H, W, dim, out_itemsize, budget_bytes):
    """Largest legal row tile TH (divisor of H) whose VMEM estimate fits budget."""
    C4 = 4 * dim
    # Full weight (double-buffered allocation, fetched once) + tiny constants.
    fixed = 2 * 16 * dim * dim * 4 + 2 * (C4 * 4 + 2 * 4 * C4 + C4) * 4

    def est(th):
        tl = th * W
        return (2 * tl * dim * 4            # x block, double-buffered, f32
                + 2 * tl * C4 * out_itemsize  # out block, double-buffered
                + 2 * tl * C4 * 4            # ~2 f32 full-tile LN temporaries
                + fixed)

    legal = [th for th in range(1, H + 1)
             if H % th == 0 and (th == H or (th * W) % 8 == 0)]
    fitting = [th for th in legal if est(th) <= budget_bytes]
    th = max(fitting) if fitting else min(legal)
    return th, est(th)


def final_patch_expand_x4(x, w, gamma, beta, H, W, *,
                          out_dtype=jnp.bfloat16, vmem_budget_bytes=None):
    """x: (B, H*W, dim) f32, w: (dim, 16*dim) f32 -> (B, 16*H*W, dim) out_dtype."""
    B, L, dim = x.shape
    assert L == H * W, "input feature has wrong size"
    assert w.shape == (dim, 16 * dim)
    # The per-p1 weight slice (dim, 4*dim) needs a 128-lane-aligned minor dim.
    # TODO(synk): add a fallback (whole-16*dim block + post transpose) for dims
    # that are not multiples of 32; DAEFormer dims (32/64/96/...) all are.
    assert dim % 32 == 0, "dim must be a multiple of 32 for the fused rearrange"
    C4 = 4 * dim
    out_itemsize = jnp.dtype(out_dtype).itemsize

    # Generation-aware VMEM budget / compiler limit (128 MiB v5e/v6e, 64 MiB v7x).
    cap = _vmem_capacity_bytes()
    budget = vmem_budget_bytes if vmem_budget_bytes is not None else int(0.45 * cap)
    budget = min(budget, int(0.55 * cap))
    TH, est_bytes = _choose_row_tile(H, W, dim, out_itemsize, budget)
    vmem_limit = max(32 << 20, int(1.5 * est_bytes) + (4 << 20))
    vmem_limit = min(vmem_limit, int(0.92 * cap))

    # (batch, row tile, p1); p1 innermost so x tile + resident weight are reused.
    grid = (B, H // TH, 4)

    x = x.astype(jnp.float32)
    # p1-major weight (4, dim, 4*dim): columns of w are ordered (p1, p2, c).
    w3 = jnp.transpose(w.astype(jnp.float32).reshape(dim, 4, C4), (1, 0, 2))

    # 0/1 group matrices mapping the (p2, c) lane layout to its 4 p2 groups.
    lane_group = jnp.arange(C4, dtype=jnp.int32) // dim
    seg_b = (jnp.arange(4, dtype=jnp.int32)[:, None] == lane_group[None, :]
             ).astype(jnp.float32)                            # (4, 4*dim)
    seg_r = seg_b.T                                           # (4*dim, 4)
    g4 = jnp.tile(gamma.reshape(1, dim).astype(jnp.float32), (1, 4))  # (1, 4*dim)
    b4 = jnp.tile(beta.reshape(1, dim).astype(jnp.float32), (1, 4))   # (1, 4*dim)
    seg_bg = seg_b * g4                                       # gamma-scaled broadcast

    cost = pl.CostEstimate(
        flops=2 * B * L * dim * 16 * dim,
        transcendentals=B * L * 16,
        bytes_accessed=(4 * B * L * dim + 4 * dim * 16 * dim
                        + out_itemsize * B * L * 16 * dim),
    )

    out = pl.pallas_call(
        _expand_rearrange_ln_kernel,
        out_shape=jax.ShapeDtypeStruct((B, H, 4, W, C4), out_dtype),
        grid=grid,
        in_specs=[
            # x tokens for TH image rows (independent of p1 -> reused across p1).
            pl.BlockSpec((None, TH * W, dim), lambda b, hi, p1: (b, hi, 0)),
            # full expand weight, constant block index -> resident in VMEM.
            pl.BlockSpec((4, dim, C4), lambda b, hi, p1: (0, 0, 0)),
            # small constants.
            pl.BlockSpec((C4, 4), lambda b, hi, p1: (0, 0)),
            pl.BlockSpec((4, C4), lambda b, hi, p1: (0, 0)),
            pl.BlockSpec((4, C4), lambda b, hi, p1: (0, 0)),
            pl.BlockSpec((1, C4), lambda b, hi, p1: (0, 0)),
        ],
        # Output laid out (B, H, p1, W, (p2 c)); block is lane-dense (width 4*dim).
        out_specs=pl.BlockSpec((None, TH, None, W, C4),
                               lambda b, hi, p1: (b, hi, p1, 0, 0)),
        compiler_params=pltpu.CompilerParams(
            dimension_semantics=("parallel", "parallel", "arbitrary"),
            vmem_limit_bytes=vmem_limit,
        ),
        cost_estimate=cost,
    )(x, w3, seg_r, seg_b, seg_bg, b4)

    # Row-major (B, H, 4, W, 4, dim) == (b, (h p1), (w p2), c): free reshape,
    # no transpose and no second HBM pass over the 16x tensor.
    return out.reshape(B, 16 * H * W, dim)


def _reference(x, w, gamma, beta, H, W):
    B, L, dim = x.shape
    y = x @ w                                                 # (B, L, 16*dim)
    y = y.reshape(B, H, W, 4, 4, dim)
    y = jnp.transpose(y, (0, 1, 3, 2, 4, 5)).reshape(B, 16 * H * W, dim)
    mean = jnp.mean(y, axis=-1, keepdims=True)
    var = jnp.mean((y - mean) ** 2, axis=-1, keepdims=True)
    return (y - mean) * jax.lax.rsqrt(var + EPS) * gamma + beta


if __name__ == "__main__":
    # Small shapes consistent with the module: input_resolution=(8, 8), dim=32.
    B, H, W, dim = 2, 8, 8, 32
    L = H * W

    key = jax.random.PRNGKey(0)
    kx, kw, kg, kb = jax.random.split(key, 4)
    x = jax.random.normal(kx, (B, L, dim), dtype=jnp.float32)
    # nn.Linear(dim, 16*dim, bias=False): weight (16*dim, dim); y = x @ W^T.
    w_t = jax.random.normal(kw, (16 * dim, dim), dtype=jnp.float32) * 0.05
    w = w_t.T                                                 # (dim, 16*dim)
    gamma = 1.0 + 0.1 * jax.random.normal(kg, (dim,), dtype=jnp.float32)
    beta = 0.1 * jax.random.normal(kb, (dim,), dtype=jnp.float32)

    out = final_patch_expand_x4(x, w, gamma, beta, H, W)
    out = jax.block_until_ready(out)

    ref = _reference(x, w, gamma, beta, H, W)
    assert out.shape == (B, 16 * H * W, dim)
    # Tolerance covers the bf16 output store (~2^-9 relative) plus MXU
    # pass-precision differences vs the XLA f32 reference.
    err = jnp.max(jnp.abs(out.astype(jnp.float32) - ref))
    assert jnp.allclose(out.astype(jnp.float32), ref, atol=3e-2, rtol=3e-2), float(err)

    print("KERNEL_OK")
</pallas_src>

<mosaic_0001>
module attributes {stable_mosaic.version = 11 : i64} {
  func.func @_expand_rearrange_ln_kernel(%arg0: i32, %arg1: i32, %arg2: i32, %arg3: memref<1x64x32xf32, #tpu.memory_space<vmem>>, %arg4: memref<4x32x128xf32, #tpu.memory_space<vmem>>, %arg5: memref<128x4xf32, #tpu.memory_space<vmem>>, %arg6: memref<4x128xf32, #tpu.memory_space<vmem>>, %arg7: memref<4x128xf32, #tpu.memory_space<vmem>>, %arg8: memref<1x128xf32, #tpu.memory_space<vmem>>, %arg9: memref<1x8x1x8x128xbf16, #tpu.memory_space<vmem>>) attributes {dimension_semantics = [#tpu.dimension_semantics<parallel>, #tpu.dimension_semantics<parallel>, #tpu.dimension_semantics<arbitrary>], iteration_bounds = array<i64: 2, 1, 4>, scalar_prefetch = 0 : i64, scratch_operands = 0 : i64, tpu.core_type = #tpu.core_type<tc>, window_params = [{transform_indices = @transform_0, window_bounds = array<i64: 1, 64, 32>}, {pipeline_mode = #tpu.pipeline_mode<synchronous>, transform_indices = @transform_1, window_bounds = array<i64: 4, 32, 128>}, {pipeline_mode = #tpu.pipeline_mode<synchronous>, transform_indices = @transform_2, window_bounds = array<i64: 128, 4>}, {pipeline_mode = #tpu.pipeline_mode<synchronous>, transform_indices = @transform_3, window_bounds = array<i64: 4, 128>}, {pipeline_mode = #tpu.pipeline_mode<synchronous>, transform_indices = @transform_4, window_bounds = array<i64: 4, 128>}, {pipeline_mode = #tpu.pipeline_mode<synchronous>, transform_indices = @transform_5, window_bounds = array<i64: 1, 128>}, {transform_indices = @transform_6, window_bounds = array<i64: 1, 8, 1, 8, 128>}]} {
    %c0 = arith.constant 0 : index
    %c0_0 = arith.constant 0 : index
    %c0_1 = arith.constant 0 : index
    %0 = vector.load %arg3[%c0, %c0_0, %c0_1] : memref<1x64x32xf32, #tpu.memory_space<vmem>>, vector<1x64x32xf32>
    %1 = vector.shape_cast %0 : vector<1x64x32xf32> to vector<64x32xf32>
    %2 = arith.index_cast %arg2 : i32 to index
    %c0_2 = arith.constant 0 : index
    %c0_3 = arith.constant 0 : index
    %3 = vector.load %arg4[%2, %c0_2, %c0_3] : memref<4x32x128xf32, #tpu.memory_space<vmem>>, vector<1x32x128xf32>
    %4 = vector.shape_cast %3 : vector<1x32x128xf32> to vector<32x128xf32>
    %cst = arith.constant dense<0.000000e+00> : vector<64x128xf32>
    %5 = tpu.matmul %1, %4, %cst {dimension_numbers = #tpu.dot_dimension_numbers<[1], [0], [0], [1], [0, 0, 1, 1], [], []>} : vector<64x32xf32>, vector<32x128xf32>, vector<64x128xf32> -> vector<64x128xf32>
    %c0_4 = arith.constant 0 : index
    %c0_5 = arith.constant 0 : index
    %6 = vector.load %arg5[%c0_4, %c0_5] : memref<128x4xf32, #tpu.memory_space<vmem>>, vector<128x4xf32>
    %cst_6 = arith.constant dense<0.000000e+00> : vector<64x4xf32>
    %7 = tpu.matmul %5, %6, %cst_6 {dimension_numbers = #tpu.dot_dimension_numbers<[1], [0], [0], [1], [0, 0, 1, 1], [], []>} : vector<64x128xf32>, vector<128x4xf32>, vector<64x4xf32> -> vector<64x4xf32>
    %cst_7 = arith.constant 3.125000e-02 : f32
    %8 = vector.broadcast %cst_7 : f32 to vector<64x4xf32>
    %9 = arith.mulf %7, %8 : vector<64x4xf32>
    %c0_8 = arith.constant 0 : index
    %c0_9 = arith.constant 0 : index
    %10 = vector.load %arg6[%c0_8, %c0_9] : memref<4x128xf32, #tpu.memory_space<vmem>>, vector<4x128xf32>
    %cst_10 = arith.constant dense<0.000000e+00> : vector<64x128xf32>
    %11 = tpu.matmul %9, %10, %cst_10 {dimension_numbers = #tpu.dot_dimension_numbers<[1], [0], [0], [1], [0, 0, 1, 1], [], []>} : vector<64x4xf32>, vector<4x128xf32>, vector<64x128xf32> -> vector<64x128xf32>
    %12 = arith.subf %5, %11 : vector<64x128xf32>
    %13 = arith.mulf %12, %12 : vector<64x128xf32>
    %cst_11 = arith.constant dense<0.000000e+00> : vector<64x4xf32>
    %14 = tpu.matmul %13, %6, %cst_11 {dimension_numbers = #tpu.dot_dimension_numbers<[1], [0], [0], [1], [0, 0, 1, 1], [], []>} : vector<64x128xf32>, vector<128x4xf32>, vector<64x4xf32> -> vector<64x4xf32>
    %cst_12 = arith.constant 3.125000e-02 : f32
    %15 = vector.broadcast %cst_12 : f32 to vector<64x4xf32>
    %16 = arith.mulf %14, %15 : vector<64x4xf32>
    %cst_13 = arith.constant 9.99999974E-6 : f32
    %17 = vector.broadcast %cst_13 : f32 to vector<64x4xf32>
    %18 = arith.addf %16, %17 : vector<64x4xf32>
    %19 = math.rsqrt %18 : vector<64x4xf32>
    %c0_14 = arith.constant 0 : index
    %c0_15 = arith.constant 0 : index
    %20 = vector.load %arg7[%c0_14, %c0_15] : memref<4x128xf32, #tpu.memory_space<vmem>>, vector<4x128xf32>
    %cst_16 = arith.constant dense<0.000000e+00> : vector<64x128xf32>
    %21 = tpu.matmul %19, %20, %cst_16 {dimension_numbers = #tpu.dot_dimension_numbers<[1], [0], [0], [1], [0, 0, 1, 1], [], []>} : vector<64x4xf32>, vector<4x128xf32>, vector<64x128xf32> -> vector<64x128xf32>
    %22 = arith.mulf %12, %21 : vector<64x128xf32>
    %c0_17 = arith.constant 0 : index
    %c0_18 = arith.constant 0 : index
    %23 = vector.load %arg8[%c0_17, %c0_18] : memref<1x128xf32, #tpu.memory_space<vmem>>, vector<1x128xf32>
    %24 = vector.broadcast %23 : vector<1x128xf32> to vector<64x128xf32>
    %25 = arith.addf %22, %24 : vector<64x128xf32>
    %26 = vector.shape_cast %25 : vector<64x128xf32> to vector<8x8x128xf32>
    %27 = arith.truncf %26 : vector<8x8x128xf32> to vector<8x8x128xbf16>
    %c0_19 = arith.constant 0 : index
    %c0_20 = arith.constant 0 : index
    %c0_21 = arith.constant 0 : index
    %c0_22 = arith.constant 0 : index
    %c0_23 = arith.constant 0 : index
    %28 = vector.load %arg9[%c0_19, %c0_20, %c0_21, %c0_22, %c0_23] : memref<1x8x1x8x128xbf16, #tpu.memory_space<vmem>>, vector<1x8x1x8x128xbf16>
    %29 = vector.shape_cast %28 : vector<1x8x1x8x128xbf16> to vector<8x8x128xbf16>
    %30 = vector.shape_cast %27 : vector<8x8x128xbf16> to vector<1x8x1x8x128xbf16>
    tpu.vector_store %arg9[%c0_19, %c0_20, %c0_21, %c0_22, %c0_23], %30 {strides = array<i32>} : memref<1x8x1x8x128xbf16, #tpu.memory_space<vmem>>, vector<1x8x1x8x128xbf16>,
    return
  }
  func.func @transform_0(%arg0: i32, %arg1: i32, %arg2: i32) -> (i32, i32, i32) {
    %c0_i32 = arith.constant 0 : i32
    %c0_i32_0 = arith.constant 0 : i32
    return %arg0, %arg1, %c0_i32 : i32, i32, i32
  }
  func.func @transform_1(%arg0: i32, %arg1: i32, %arg2: i32) -> (i32, i32, i32) {
    %c0_i32 = arith.constant 0 : i32
    %c0_i32_0 = arith.constant 0 : i32
    %c0_i32_1 = arith.constant 0 : i32
    %c0_i32_2 = arith.constant 0 : i32
    return %c0_i32, %c0_i32_0, %c0_i32_1 : i32, i32, i32
  }
  func.func @transform_2(%arg0: i32, %arg1: i32, %arg2: i32) -> (i32, i32) {
    %c0_i32 = arith.constant 0 : i32
    %c0_i32_0 = arith.constant 0 : i32
    %c0_i32_1 = arith.constant 0 : i32
    return %c0_i32, %c0_i32_0 : i32, i32
  }
  func.func @transform_3(%arg0: i32, %arg1: i32, %arg2: i32) -> (i32, i32) {
    %c0_i32 = arith.constant 0 : i32
    %c0_i32_0 = arith.constant 0 : i32
    %c0_i32_1 = arith.constant 0 : i32
    return %c0_i32, %c0_i32_0 : i32, i32
  }
  func.func @transform_4(%arg0: i32, %arg1: i32, %arg2: i32) -> (i32, i32) {
    %c0_i32 = arith.constant 0 : i32
    %c0_i32_0 = arith.constant 0 : i32
    %c0_i32_1 = arith.constant 0 : i32
    return %c0_i32, %c0_i32_0 : i32, i32
  }
  func.func @transform_5(%arg0: i32, %arg1: i32, %arg2: i32) -> (i32, i32) {
    %c0_i32 = arith.constant 0 : i32
    %c0_i32_0 = arith.constant 0 : i32
    %c0_i32_1 = arith.constant 0 : i32
    return %c0_i32, %c0_i32_0 : i32, i32
  }
  func.func @transform_6(%arg0: i32, %arg1: i32, %arg2: i32) -> (i32, i32, i32, i32, i32) {
    %c0_i32 = arith.constant 0 : i32
    %c0_i32_0 = arith.constant 0 : i32
    %c0_i32_1 = arith.constant 0 : i32
    return %arg0, %arg1, %arg2, %c0_i32, %c0_i32_0 : i32, i32, i32, i32, i32
  }
}

</mosaic_0001>

<llo_original>
// kernel: tpu_custom_call.1
$region0: #{tpu_custom_call.1}
  #allocation0 [shape = 'u32[]', space=smem, size = 0x4, offset = 0x4, fixed_abs, tag = 'smem constant byte address 0x4 - core index']
  #allocation1 [shape = 'u32[72,128]{1,0:T(1,128)}', space=vmem, size = 0x9000, scoped, tag = 'internal scratch']
  %s0 = inlined_call_operand.vmem [shape: f32[2,64,32], index: 0, kind: input, shape index: {}]
  %s1 = inlined_call_operand.vmem [shape: f32[4,32,128], index: 1, kind: input, shape index: {}]
  %s2 = inlined_call_operand.vmem [shape: f32[128,4], index: 2, kind: input, shape index: {}]
  %s3 = inlined_call_operand.vmem [shape: f32[4,128], index: 3, kind: input, shape index: {}]
  %s4 = inlined_call_operand.vmem [shape: f32[4,128], index: 4, kind: input, shape index: {}]
  %s5 = inlined_call_operand.vmem [shape: f32[1,128], index: 5, kind: input, shape index: {}]
  %s6 = inlined_call_operand.hbm [shape: bf16[2,8,4,8,128], index: 6, kind: output, shape index: {}]
  %s7 = sld [smem:[#allocation0]]
  $region57: #{tpu_custom_call.1} parent=0
    _
  %s9 = ssub.s32 1, %s7
  %s10 = scalar_select 0, %s9, %s7
  $region1: #{tpu_custom_call.1} parent=0
    #allocation2 [shape = 'u8[32768]{0}', space=vmem, size = 0x8000, scoped, tag = 'output window, operand 0']
    #allocation3 [shape = 's32[2]{0}', space=sflag, size = 0x8, scoped, tag = 'scoped memory for tpu_custom_call.1']
    %11 = vsyncpa [#allocation3], 0
    %s12 = scalar_lea.sflag [#allocation3], 1
    %13 = vsyncpa %s12, 0
    loop: start=0, step=1, limit=10
    $region2: #{tpu_custom_call.1} parent=1 // loop_pre_header
      _
    $region3: #{tpu_custom_call.1} parent=1 // loop_header
      %s15 = sphi 0, %s19
      %p16 = scmp.ge.s32.totalorder %s15, 10
      %s22 = sphi 0, %s41
      %s23 = sphi 0, %s37
      %s24 = sphi 0, %s33
      %s25 = sphi 0, %s22
      %s26 = sphi 0, %s23
      %s27 = sphi 0, %s24
      %s28 = sphi 0, %s25
      %s29 = sphi 0, %s26
      %s30 = sphi 0, %s27
      %s46 = sphi 0, %s48
      %s49 = sphi 0, %s46
      %s50 = sphi 0, %s49
      %s66 = sphi 0, %s50
      %s70 = sphi 0, %s70
      %s72 = sphi 0, %s70
      %s73 = sphi 0, %s72
      %s87 = sphi 0, %s73
      %s91 = sphi 0, %s91
      %s93 = sphi 0, %s91
      %s94 = sphi 0, %s93
      %s108 = sphi 0, %s94
      %s112 = sphi 0, %s112
      %s114 = sphi 0, %s112
      %s115 = sphi 0, %s114
      %s129 = sphi 0, %s115
      %s133 = sphi 0, %s133
      %s135 = sphi 0, %s133
      %s136 = sphi 0, %s135
      %s150 = sphi 0, %s136
      %s154 = sphi 0, %s154
      %s156 = sphi 0, %s154
      %s157 = sphi 0, %s156
      %s171 = sphi 0, %s157
      %s181 = sphi 0, %s183
      %s184 = sphi 0, %s181
      %s185 = sphi 0, %s184
      %s201 = sphi 0, %s185
    $region4: #{tpu_custom_call.1} parent=1 // loop_header_branch
      %18 = sbr.rel (%p16) target = $region8
    $region5: #{tpu_custom_call.1} parent=1 // loop_body
      %s20 = ssub.s32 %s15, 1
      %s21 = ssub.s32 %s15, 2
      %s31 = sadd.s32 1, %s24
      %p32 = scmp.ge.s32.totalorder %s31, 4
      %s33 = scalar_select %p32, 0, %s31
      %s34 = sadd.s32 1, %s23
      %s35 = scalar_select %p32, %s34, %s23
      %p36 = scmp.ge.s32.totalorder %s35, 1
      %s37 = scalar_select %p36, 0, %s35
      %s38 = sadd.s32 1, %s22
      %s39 = scalar_select %p36, %s38, %s22
      %p40 = scmp.ge.s32.totalorder %s39, 2
      %s41 = scalar_select %p40, 0, %s39
      %s42 = ssub.s32 %s22, %s41
      %s43 = ssub.s32 %s23, %s37
      %s44 = sor.u32 %s42, %s43
      %p45 = scmp.eq.s32.totalorder %s44, 0
      %s47 = sadd.s32 %s46, 1
      %s48 = scalar_select %p45, %s46, %s47
      %p51 = pneg %p45
      %p52 = scmp.eq.s32.totalorder %s15, 7
      %p53 = por %p51, %p52
      %p54 = scmp.ne.s32.totalorder %s46, %s49
      %p55 = scmp.eq.s32.totalorder %s15, 0
      %p56 = por %p54, %p55
      %p57 = scmp.ne.s32.totalorder %s46, %s49
      %p58 = scmp.eq.s32.totalorder %s20, 7
      %p59 = por %p57, %p58
      %p60 = scmp.ne.s32.totalorder %s49, %s50
      %p61 = scmp.eq.s32.totalorder %s20, 0
      %p62 = por %p60, %p61
      %p63 = scmp.ne.s32.totalorder %s49, %s50
      %p64 = scmp.eq.s32.totalorder %s21, 7
      %p65 = por %p63, %p64
      %p67 = scmp.ne.s32.totalorder %s50, %s66
      %p68 = scmp.eq.s32.totalorder %s21, 0
      %p69 = por %p67, %p68
      %s71 = sadd.s32 %s70, 1
      %p74 = scmp.eq.s32.totalorder %s15, 7
      %p75 = scmp.ne.s32.totalorder %s70, %s72
      %p76 = scmp.eq.s32.totalorder %s15, 0
      %p77 = por %p75, %p76
      %p78 = scmp.ne.s32.totalorder %s70, %s72
      %p79 = scmp.eq.s32.totalorder %s20, 7
      %p80 = por %p78, %p79
      %p81 = scmp.ne.s32.totalorder %s72, %s73
      %p82 = scmp.eq.s32.totalorder %s20, 0
      %p83 = por %p81, %p82
      %p84 = scmp.ne.s32.totalorder %s72, %s73
      %p85 = scmp.eq.s32.totalorder %s21, 7
      %p86 = por %p84, %p85
      %p88 = scmp.ne.s32.totalorder %s73, %s87
      %p89 = scmp.eq.s32.totalorder %s21, 0
      %p90 = por %p88, %p89
      %s92 = sadd.s32 %s91, 1
      %p95 = scmp.eq.s32.totalorder %s15, 7
      %p96 = scmp.ne.s32.totalorder %s91, %s93
      %p97 = scmp.eq.s32.totalorder %s15, 0
      %p98 = por %p96, %p97
      %p99 = scmp.ne.s32.totalorder %s91, %s93
      %p100 = scmp.eq.s32.totalorder %s20, 7
      %p101 = por %p99, %p100
      %p102 = scmp.ne.s32.totalorder %s93, %s94
      %p103 = scmp.eq.s32.totalorder %s20, 0
      %p104 = por %p102, %p103
      %p105 = scmp.ne.s32.totalorder %s93, %s94
      %p106 = scmp.eq.s32.totalorder %s21, 7
      %p107 = por %p105, %p106
      %p109 = scmp.ne.s32.totalorder %s94, %s108
      %p110 = scmp.eq.s32.totalorder %s21, 0
      %p111 = por %p109, %p110
      %s113 = sadd.s32 %s112, 1
      %p116 = scmp.eq.s32.totalorder %s15, 7
      %p117 = scmp.ne.s32.totalorder %s112, %s114
      %p118 = scmp.eq.s32.totalorder %s15, 0
      %p119 = por %p117, %p118
      %p120 = scmp.ne.s32.totalorder %s112, %s114
      %p121 = scmp.eq.s32.totalorder %s20, 7
      %p122 = por %p120, %p121
      %p123 = scmp.ne.s32.totalorder %s114, %s115
      %p124 = scmp.eq.s32.totalorder %s20, 0
      %p125 = por %p123, %p124
      %p126 = scmp.ne.s32.totalorder %s114, %s115
      %p127 = scmp.eq.s32.totalorder %s21, 7
      %p128 = por %p126, %p127
      %p130 = scmp.ne.s32.totalorder %s115, %s129
      %p131 = scmp.eq.s32.totalorder %s21, 0
      %p132 = por %p130, %p131
      %s134 = sadd.s32 %s133, 1
      %p137 = scmp.eq.s32.totalorder %s15, 7
      %p138 = scmp.ne.s32.totalorder %s133, %s135
      %p139 = scmp.eq.s32.totalorder %s15, 0
      %p140 = por %p138, %p139
      %p141 = scmp.ne.s32.totalorder %s133, %s135
      %p142 = scmp.eq.s32.totalorder %s20, 7
      %p143 = por %p141, %p142
      %p144 = scmp.ne.s32.totalorder %s135, %s136
      %p145 = scmp.eq.s32.totalorder %s20, 0
      %p146 = por %p144, %p145
      %p147 = scmp.ne.s32.totalorder %s135, %s136
      %p148 = scmp.eq.s32.totalorder %s21, 7
      %p149 = por %p147, %p148
      %p151 = scmp.ne.s32.totalorder %s136, %s150
      %p152 = scmp.eq.s32.totalorder %s21, 0
      %p153 = por %p151, %p152
      %s155 = sadd.s32 %s154, 1
      %p158 = scmp.eq.s32.totalorder %s15, 7
      %p159 = scmp.ne.s32.totalorder %s154, %s156
      %p160 = scmp.eq.s32.totalorder %s15, 0
      %p161 = por %p159, %p160
      %p162 = scmp.ne.s32.totalorder %s154, %s156
      %p163 = scmp.eq.s32.totalorder %s20, 7
      %p164 = por %p162, %p163
      %p165 = scmp.ne.s32.totalorder %s156, %s157
      %p166 = scmp.eq.s32.totalorder %s20, 0
      %p167 = por %p165, %p166
      %p168 = scmp.ne.s32.totalorder %s156, %s157
      %p169 = scmp.eq.s32.totalorder %s21, 7
      %p170 = por %p168, %p169
      %p172 = scmp.ne.s32.totalorder %s157, %s171
      %p173 = scmp.eq.s32.totalorder %s21, 0
      %p174 = por %p172, %p173
      %s175 = ssub.s32 %s22, %s41
      %s176 = ssub.s32 %s23, %s37
      %s177 = sor.u32 %s175, %s176
      %s178 = ssub.s32 %s24, %s33
      %s179 = sor.u32 %s177, %s178
      %p180 = scmp.eq.s32.totalorder %s179, 0
      %s182 = sadd.s32 %s181, 1
      %s183 = scalar_select %p180, %s181, %s182
      %p186 = pneg %p180
      %p187 = scmp.eq.s32.totalorder %s15, 7
      %p188 = por %p186, %p187
      %p189 = scmp.ne.s32.totalorder %s181, %s184
      %p190 = scmp.eq.s32.totalorder %s15, 0
      %p191 = por %p189, %p190
      %p192 = scmp.ne.s32.totalorder %s181, %s184
      %p193 = scmp.eq.s32.totalorder %s20, 7
      %p194 = por %p192, %p193
      %p195 = scmp.ne.s32.totalorder %s184, %s185
      %p196 = scmp.eq.s32.totalorder %s20, 0
      %p197 = por %p195, %p196
      %p198 = scmp.ne.s32.totalorder %s184, %s185
      %p199 = scmp.eq.s32.totalorder %s21, 7
      %p200 = por %p198, %p199
      %p202 = scmp.ne.s32.totalorder %s185, %s201
      %p203 = scmp.eq.s32.totalorder %s21, 0
      %p204 = por %p202, %p203
      %p205 = scmp.le.s32.totalorder 1, %s15
      %p206 = scmp.lt.s32.totalorder %s15, 9
      %p207 = pnand %p205, %p206
      %p208 = pneg %p207
      // Predicated region
      $region9: #{tpu_custom_call.1} parent=5 // pred_check
        _
      $region10: #{tpu_custom_call.1} parent=5 // pred_check_branch
        %210 = sbr.rel (%p207) target = $region12
      $region11: #{tpu_custom_call.1} parent=5 // pred_region
        %s211 = ssub.s32 %s15, 1
        // Predicated region
        $region13: #{tpu_custom_call.1} parent=11 // pred_check
          %p212 = pneg %p83
        $region14: #{tpu_custom_call.1} parent=11 // pred_check_branch
          %214 = sbr.rel (%p212) target = $region16
        $region15: #{tpu_custom_call.1} parent=11 // pred_region
          _
        $region16: #{tpu_custom_call.1} parent=11 // pred_fallthru
          _
        // Predicated region
        $region17: #{tpu_custom_call.1} parent=11 // pred_check
          %p215 = pneg %p104
        $region18: #{tpu_custom_call.1} parent=11 // pred_check_branch
          %217 = sbr.rel (%p215) target = $region20
        $region19: #{tpu_custom_call.1} parent=11 // pred_region
          _
        $region20: #{tpu_custom_call.1} parent=11 // pred_fallthru
          _
        // Predicated region
        $region21: #{tpu_custom_call.1} parent=11 // pred_check
          %p218 = pneg %p125
        $region22: #{tpu_custom_call.1} parent=11 // pred_check_branch
          %220 = sbr.rel (%p218) target = $region24
        $region23: #{tpu_custom_call.1} parent=11 // pred_region
          _
        $region24: #{tpu_custom_call.1} parent=11 // pred_fallthru
          _
        // Predicated region
        $region25: #{tpu_custom_call.1} parent=11 // pred_check
          %p221 = pneg %p146
        $region26: #{tpu_custom_call.1} parent=11 // pred_check_branch
          %223 = sbr.rel (%p221) target = $region28
        $region27: #{tpu_custom_call.1} parent=11 // pred_region
          _
        $region28: #{tpu_custom_call.1} parent=11 // pred_fallthru
          _
        // Predicated region
        $region29: #{tpu_custom_call.1} parent=11 // pred_check
          %p224 = pneg %p167
        $region30: #{tpu_custom_call.1} parent=11 // pred_check_branch
          %226 = sbr.rel (%p224) target = $region32
        $region31: #{tpu_custom_call.1} parent=11 // pred_region
          _
        $region32: #{tpu_custom_call.1} parent=11 // pred_fallthru
          _
      $region12: #{tpu_custom_call.1} parent=5 // pred_fallthru
        _
      %p227 = scmp.lt.s32.totalorder %s15, 8
      // Predicated region
      $region33: #{tpu_custom_call.1} parent=5 // pred_check
        %p228 = pneg %p227
      $region34: #{tpu_custom_call.1} parent=5 // pred_check_branch
        %230 = sbr.rel (%p228) target = $region36
      $region35: #{tpu_custom_call.1} parent=5 // pred_region
        // Predicated region
        $region37: #{tpu_custom_call.1} parent=35 // pred_check
          %p231 = pneg %p56
        $region38: #{tpu_custom_call.1} parent=35 // pred_check_branch
          %233 = sbr.rel (%p231) target = $region40
        $region39: #{tpu_custom_call.1} parent=35 // pred_region
          %s234 = smul.u32 8, %s23
          %p235 = scmp.lt.s32.totalorder %s22, 1
          %s236 = scalar_select %p235, %s22, 1
          %p237 = scmp.lt.s32.totalorder %s234, 7
          %s238 = scalar_select %p237, %s234, 7
          %s239 = smul.addr %s236, 8
          %s240 = sadd.s32 %s238, %s239
          %s241 = smul.addr %s240, 8
          %s242 = scalar_lea.vmem %s0, %s241
          %s243 = smul.u32 8, %s23
        $region40: #{tpu_custom_call.1} parent=35 // pred_fallthru
          _
      $region36: #{tpu_custom_call.1} parent=5 // pred_fallthru
        _
      %p244 = scmp.le.s32.totalorder 1, %s15
      %p245 = scmp.lt.s32.totalorder %s15, 9
      %p246 = pnand %p244, %p245
      %p247 = pneg %p246
      // Predicated region
      $region41: #{tpu_custom_call.1} parent=5 // pred_check
        _
      $region42: #{tpu_custom_call.1} parent=5 // pred_check_branch
        %249 = sbr.rel (%p246) target = $region44
      $region43: #{tpu_custom_call.1} parent=5 // pred_region
        %s250 = ssub.s32 %s15, 1
        %s251 = smul.u32 8, %s26
        %p252 = scmp.lt.s32.totalorder %s25, 1
        %s253 = scalar_select %p252, %s25, 1
        %p254 = scmp.lt.s32.totalorder %s251, 7
        %s255 = scalar_select %p254, %s251, 7
        %s256 = smul.addr %s253, 8
        %s257 = sadd.s32 %s255, %s256
        %s258 = smul.addr %s257, 8
        %s259 = scalar_lea.vmem %s0, %s258
        %p260 = pneg %p62
        %p261 = pneg %p59
        %p262 = pneg %p83
        %p263 = pneg %p80
        %p264 = pneg %p104
        %p265 = pneg %p101
        %p266 = pneg %p125
        %p267 = pneg %p122
        %p268 = pneg %p146
        %p269 = pneg %p143
        %p270 = pneg %p167
        %p271 = pneg %p164
        %p272 = pneg %p197
        %p273 = pneg %p194
        %s274 = sand.u32 %s184, 1
        %s275 = scalar_lea.sflag [#allocation3], %s274
        %s276 = sand.u32 %s184, 1
        %s277 = smul.addr %s276, 32
        %s278 = scalar_lea.vmem [#allocation2], %s277
        %s279 = smul.u32 8, %s26
        %p280 = scmp.lt.s32.totalorder %s25, 1
        %s281 = scalar_select %p280, %s25, 1
        %p282 = scmp.lt.s32.totalorder %s279, 7
        %s283 = scalar_select %p282, %s279, 7
        %s284 = smul.addr %s281, 8
        %s285 = sadd.s32 %s283, %s284
        %s286 = smul.addr %s285, 8
        %s287 = scalar_lea.vmem %s0, %s286
        %s288 = smul.u32 8, %s26
        %s289 = smul.u32 8, %s26
        %v290 = vld [vmem:[%s287] sm:$0xff]
        %v291 = vld [vmem:[%s287 + $0x8] sm:$0xff]
        %v292 = vld [vmem:[%s287 + $0x10] sm:$0xff]
        %v293 = vld [vmem:[%s287 + $0x18] sm:$0xff]
        %v294 = vld [vmem:[%s287 + $0x20] sm:$0xff]
        %v295 = vld [vmem:[%s287 + $0x28] sm:$0xff]
        %v296 = vld [vmem:[%s287 + $0x30] sm:$0xff]
        %v297 = vld [vmem:[%s287 + $0x38] sm:$0xff]
        %s298 = smul.u32 %s27, 32
        %s299 = scalar_lea.vmem %s1, %s298
        %v300 = vld [vmem:[%s299] sm:$0xff]
        %v301 = vld [vmem:[%s299 + $0x8] sm:$0xff]
        %v302 = vld [vmem:[%s299 + $0x10] sm:$0xff]
        %v303 = vld [vmem:[%s299 + $0x18] sm:$0xff]
        %vm304 = vcmask 261120
        %v306 = vsel %vm304, %v290, 0
        %v309 = vsel %vm304, %v291, 0
        %v312 = vsel %vm304, %v292, 0
        %v315 = vsel %vm304, %v293, 0
        %v318 = vsel %vm304, %v294, 0
        %v321 = vsel %vm304, %v295, 0
        %v324 = vsel %vm304, %v296, 0
        %v327 = vsel %vm304, %v297, 0
        %329 = vmatpush.msra.mxu0 0.0
        %330 = vmatpush.msra.mxu0 0.0
        %331 = vmatpush.msra.mxu0 0.0
        %332 = vmatpush.msra.mxu0 0.0
        %333 = vmatpush.msra.mxu0 0.0
        %334 = vmatpush.msra.mxu0 0.0
        %335 = vmatpush.msra.mxu0 0.0
        %336 = vmatpush.msra.mxu0 0.0
        %337 = vmatpush.msra.mxu0 0.0
        %338 = vmatpush.msra.mxu0 0.0
        %339 = vmatpush.msra.mxu0 0.0
        %340 = vmatpush.msra.mxu0 0.0
        %341 = vmatpush.msra.mxu0 %v303
        %342 = vmatpush.msra.mxu0 %v302
        %343 = vmatpush.msra.mxu0 %v301
        %344 = vmatpush.msra.mxu0 %v300
        %345 = vmatmul.f32.gmra.mxu0 %v306
        %v346 = vpop.f32.mrf.mxu0
        %v347 = vadd.f32 0.0, %v346
        %348 = vmatmul.f32.gmra.mxu0 %v309
        %v349 = vpop.f32.mrf.mxu0
        %v350 = vadd.f32 0.0, %v349
        %351 = vmatmul.f32.gmra.mxu0 %v312
        %v352 = vpop.f32.mrf.mxu0
        %v353 = vadd.f32 0.0, %v352
        %354 = vmatmul.f32.gmra.mxu0 %v315
        %v355 = vpop.f32.mrf.mxu0
        %v356 = vadd.f32 0.0, %v355
        %357 = vmatmul.f32.gmra.mxu0 %v318
        %v358 = vpop.f32.mrf.mxu0
        %v359 = vadd.f32 0.0, %v358
        %360 = vmatmul.f32.gmra.mxu0 %v321
        %v361 = vpop.f32.mrf.mxu0
        %v362 = vadd.f32 0.0, %v361
        %363 = vmatmul.f32.gmra.mxu0 %v324
        %v364 = vpop.f32.mrf.mxu0
        %v365 = vadd.f32 0.0, %v364
        %366 = vmatmul.f32.gmra.mxu0 %v327
        %v367 = vpop.f32.mrf.mxu0
        %v368 = vadd.f32 0.0, %v367
        %369 = vdwg.mxu0
        %v370 = vld [vmem:[%s2] sm:$0xff]
        %v371 = vld [vmem:[%s2 + $0x8] sm:$0xff]
        %v372 = vld [vmem:[%s2 + $0x10] sm:$0xff]
        %v373 = vld [vmem:[%s2 + $0x18] sm:$0xff]
        %v374 = vld [vmem:[%s2 + $0x20] sm:$0xff]
        %v375 = vld [vmem:[%s2 + $0x28] sm:$0xff]
        %v376 = vld [vmem:[%s2 + $0x30] sm:$0xff]
        %v377 = vld [vmem:[%s2 + $0x38] sm:$0xff]
        %v378 = vld [vmem:[%s2 + $0x40] sm:$0xff]
        %v379 = vld [vmem:[%s2 + $0x48] sm:$0xff]
        %v380 = vld [vmem:[%s2 + $0x50] sm:$0xff]
        %v381 = vld [vmem:[%s2 + $0x58] sm:$0xff]
        %v382 = vld [vmem:[%s2 + $0x60] sm:$0xff]
        %v383 = vld [vmem:[%s2 + $0x68] sm:$0xff]
        %v384 = vld [vmem:[%s2 + $0x70] sm:$0xff]
        %v385 = vld [vmem:[%s2 + $0x78] sm:$0xff]
        %386 = vmatpush.msra.mxu0 %v385
        %387 = vmatpush.msra.mxu0 %v384
        %388 = vmatpush.msra.mxu0 %v383
        %389 = vmatpush.msra.mxu0 %v382
        %390 = vmatpush.msra.mxu0 %v381
        %391 = vmatpush.msra.mxu0 %v380
        %392 = vmatpush.msra.mxu0 %v379
        %393 = vmatpush.msra.mxu0 %v378
        %394 = vmatpush.msra.mxu0 %v377
        %395 = vmatpush.msra.mxu0 %v376
        %396 = vmatpush.msra.mxu0 %v375
        %397 = vmatpush.msra.mxu0 %v374
        %398 = vmatpush.msra.mxu0 %v373
        %399 = vmatpush.msra.mxu0 %v372
        %400 = vmatpush.msra.mxu0 %v371
        %401 = vmatpush.msra.mxu0 %v370
        %402 = vmatmul.f32.gmra.mxu0 %v347
        %v403 = vpop.f32.mrf.mxu0
        %v404 = vadd.f32 0.0, %v403
        %405 = vmatmul.f32.gmra.mxu0 %v350
        %v406 = vpop.f32.mrf.mxu0
        %v407 = vadd.f32 0.0, %v406
        %408 = vmatmul.f32.gmra.mxu0 %v353
        %v409 = vpop.f32.mrf.mxu0
        %v410 = vadd.f32 0.0, %v409
        %411 = vmatmul.f32.gmra.mxu0 %v356
        %v412 = vpop.f32.mrf.mxu0
        %v413 = vadd.f32 0.0, %v412
        %414 = vmatmul.f32.gmra.mxu0 %v359
        %v415 = vpop.f32.mrf.mxu0
        %v416 = vadd.f32 0.0, %v415
        %417 = vmatmul.f32.gmra.mxu0 %v362
        %v418 = vpop.f32.mrf.mxu0
        %v419 = vadd.f32 0.0, %v418
        %420 = vmatmul.f32.gmra.mxu0 %v365
        %v421 = vpop.f32.mrf.mxu0
        %v422 = vadd.f32 0.0, %v421
        %423 = vmatmul.f32.gmra.mxu0 %v368
        %v424 = vpop.f32.mrf.mxu0
        %v425 = vadd.f32 0.0, %v424
        %426 = vdwg.mxu0
        %v427 = vmul.f32 %v404, 0.03125
        %v428 = vmul.f32 %v407, 0.03125
        %v429 = vmul.f32 %v410, 0.03125
        %v430 = vmul.f32 %v413, 0.03125
        %v431 = vmul.f32 %v416, 0.03125
        %v432 = vmul.f32 %v419, 0.03125
        %v433 = vmul.f32 %v422, 0.03125
        %v434 = vmul.f32 %v425, 0.03125
        %v435 = vld [vmem:[%s3] sm:$0xf]
        %vm436 = vcmask 31744
        %v438 = vsel %vm436, %v427, 0
        %v441 = vsel %vm436, %v428, 0
        %v444 = vsel %vm436, %v429, 0
        %v447 = vsel %vm436, %v430, 0
        %v450 = vsel %vm436, %v431, 0
        %v453 = vsel %vm436, %v432, 0
        %v456 = vsel %vm436, %v433, 0
        %v459 = vsel %vm436, %v434, 0
        %vm461 = vcmask 1043456
        %v463 = vsel %vm461, %v435, 0
        %465 = vmatpush.msra.mxu0 0.0
        %466 = vmatpush.msra.mxu0 0.0
        %467 = vmatpush.msra.mxu0 0.0
        %468 = vmatpush.msra.mxu0 0.0
        %469 = vmatpush.msra.mxu0 0.0
        %470 = vmatpush.msra.mxu0 0.0
        %471 = vmatpush.msra.mxu0 0.0
        %472 = vmatpush.msra.mxu0 0.0
        %473 = vmatpush.msra.mxu0 0.0
        %474 = vmatpush.msra.mxu0 0.0
        %475 = vmatpush.msra.mxu0 0.0
        %476 = vmatpush.msra.mxu0 0.0
        %477 = vmatpush.msra.mxu0 0.0
        %478 = vmatpush.msra.mxu0 0.0
        %479 = vmatpush.msra.mxu0 0.0
        %480 = vmatpush.msra.mxu0 %v463
        %481 = vmatmul.f32.gmra.mxu0 %v438
        %v482 = vpop.f32.mrf.mxu0
        %v483 = vadd.f32 0.0, %v482
        %484 = vmatmul.f32.gmra.mxu0 %v441
        %v485 = vpop.f32.mrf.mxu0
        %v486 = vadd.f32 0.0, %v485
        %487 = vmatmul.f32.gmra.mxu0 %v444
        %v488 = vpop.f32.mrf.mxu0
        %v489 = vadd.f32 0.0, %v488
        %490 = vmatmul.f32.gmra.mxu0 %v447
        %v491 = vpop.f32.mrf.mxu0
        %v492 = vadd.f32 0.0, %v491
        %493 = vmatmul.f32.gmra.mxu0 %v450
        %v494 = vpop.f32.mrf.mxu0
        %v495 = vadd.f32 0.0, %v494
        %496 = vmatmul.f32.gmra.mxu0 %v453
        %v497 = vpop.f32.mrf.mxu0
        %v498 = vadd.f32 0.0, %v497
        %499 = vmatmul.f32.gmra.mxu0 %v456
        %v500 = vpop.f32.mrf.mxu0
        %v501 = vadd.f32 0.0, %v500
        %502 = vmatmul.f32.gmra.mxu0 %v459
        %v503 = vpop.f32.mrf.mxu0
        %v504 = vadd.f32 0.0, %v503
        %505 = vdwg.mxu0
        %v506 = vsub.f32 %v347, %v483
        %v507 = vsub.f32 %v350, %v486
        %v508 = vsub.f32 %v353, %v489
        %v509 = vsub.f32 %v356, %v492
        %v510 = vsub.f32 %v359, %v495
        %v511 = vsub.f32 %v362, %v498
        %v512 = vsub.f32 %v365, %v501
        %v513 = vsub.f32 %v368, %v504
        %v514 = vmul.f32 %v506, %v506
        %v515 = vmul.f32 %v507, %v507
        %v516 = vmul.f32 %v508, %v508
        %v517 = vmul.f32 %v509, %v509
        %v518 = vmul.f32 %v510, %v510
        %v519 = vmul.f32 %v511, %v511
        %v520 = vmul.f32 %v512, %v512
        %v521 = vmul.f32 %v513, %v513
        %522 = vmatpush.msra.mxu0 %v385
        %523 = vmatpush.msra.mxu0 %v384
        %524 = vmatpush.msra.mxu0 %v383
        %525 = vmatpush.msra.mxu0 %v382
        %526 = vmatpush.msra.mxu0 %v381
        %527 = vmatpush.msra.mxu0 %v380
        %528 = vmatpush.msra.mxu0 %v379
        %529 = vmatpush.msra.mxu0 %v378
        %530 = vmatpush.msra.mxu0 %v377
        %531 = vmatpush.msra.mxu0 %v376
        %532 = vmatpush.msra.mxu0 %v375
        %533 = vmatpush.msra.mxu0 %v374
        %534 = vmatpush.msra.mxu0 %v373
        %535 = vmatpush.msra.mxu0 %v372
        %536 = vmatpush.msra.mxu0 %v371
        %537 = vmatpush.msra.mxu0 %v370
        %538 = vmatmul.f32.gmra.mxu0 %v514
        %v539 = vpop.f32.mrf.mxu0
        %v540 = vadd.f32 0.0, %v539
        %541 = vmatmul.f32.gmra.mxu0 %v515
        %v542 = vpop.f32.mrf.mxu0
        %v543 = vadd.f32 0.0, %v542
        %544 = vmatmul.f32.gmra.mxu0 %v516
        %v545 = vpop.f32.mrf.mxu0
        %v546 = vadd.f32 0.0, %v545
        %547 = vmatmul.f32.gmra.mxu0 %v517
        %v548 = vpop.f32.mrf.mxu0
        %v549 = vadd.f32 0.0, %v548
        %550 = vmatmul.f32.gmra.mxu0 %v518
        %v551 = vpop.f32.mrf.mxu0
        %v552 = vadd.f32 0.0, %v551
        %553 = vmatmul.f32.gmra.mxu0 %v519
        %v554 = vpop.f32.mrf.mxu0
        %v555 = vadd.f32 0.0, %v554
        %556 = vmatmul.f32.gmra.mxu0 %v520
        %v557 = vpop.f32.mrf.mxu0
        %v558 = vadd.f32 0.0, %v557
        %559 = vmatmul.f32.gmra.mxu0 %v521
        %v560 = vpop.f32.mrf.mxu0
        %v561 = vadd.f32 0.0, %v560
        %562 = vdwg.mxu0
        %v563 = vmul.f32 %v540, 0.03125
        %v564 = vmul.f32 %v543, 0.03125
        %v565 = vmul.f32 %v546, 0.03125
        %v566 = vmul.f32 %v549, 0.03125
        %v567 = vmul.f32 %v552, 0.03125
        %v568 = vmul.f32 %v555, 0.03125
        %v569 = vmul.f32 %v558, 0.03125
        %v570 = vmul.f32 %v561, 0.03125
        %v571 = vadd.f32 %v563, 1e-05
        %v572 = vadd.f32 %v564, 1e-05
        %v573 = vadd.f32 %v565, 1e-05
        %v574 = vadd.f32 %v566, 1e-05
        %v575 = vadd.f32 %v567, 1e-05
        %v576 = vadd.f32 %v568, 1e-05
        %v577 = vadd.f32 %v569, 1e-05
        %v578 = vadd.f32 %v570, 1e-05
        %v579 = vrsqrt.pop %v571
        %v580 = vmul.f32 %v579, %v571
        %v581 = vmul.f32 %v580, %v579
        %v582 = vmul.f32 0.5, %v581
        %v583 = vsub.f32 1.5, %v582
        %v584 = vmul.f32 %v579, %v583
        %vm585 = vweird.f32 %v571
        %vm586 = vweird.f32 %v579
        %vm587 = vmor %vm585, %vm586
        %v588 = vsel %vm587, %v579, %v584
        %v589 = vrsqrt.pop %v572
        %v590 = vmul.f32 %v589, %v572
        %v591 = vmul.f32 %v590, %v589
        %v592 = vmul.f32 0.5, %v591
        %v593 = vsub.f32 1.5, %v592
        %v594 = vmul.f32 %v589, %v593
        %vm595 = vweird.f32 %v572
        %vm596 = vweird.f32 %v589
        %vm597 = vmor %vm595, %vm596
        %v598 = vsel %vm597, %v589, %v594
        %v599 = vrsqrt.pop %v573
        %v600 = vmul.f32 %v599, %v573
        %v601 = vmul.f32 %v600, %v599
        %v602 = vmul.f32 0.5, %v601
        %v603 = vsub.f32 1.5, %v602
        %v604 = vmul.f32 %v599, %v603
        %vm605 = vweird.f32 %v573
        %vm606 = vweird.f32 %v599
        %vm607 = vmor %vm605, %vm606
        %v608 = vsel %vm607, %v599, %v604
        %v609 = vrsqrt.pop %v574
        %v610 = vmul.f32 %v609, %v574
        %v611 = vmul.f32 %v610, %v609
        %v612 = vmul.f32 0.5, %v611
        %v613 = vsub.f32 1.5, %v612
        %v614 = vmul.f32 %v609, %v613
        %vm615 = vweird.f32 %v574
        %vm616 = vweird.f32 %v609
        %vm617 = vmor %vm615, %vm616
        %v618 = vsel %vm617, %v609, %v614
        %v619 = vrsqrt.pop %v575
        %v620 = vmul.f32 %v619, %v575
        %v621 = vmul.f32 %v620, %v619
        %v622 = vmul.f32 0.5, %v621
        %v623 = vsub.f32 1.5, %v622
        %v624 = vmul.f32 %v619, %v623
        %vm625 = vweird.f32 %v575
        %vm626 = vweird.f32 %v619
        %vm627 = vmor %vm625, %vm626
        %v628 = vsel %vm627, %v619, %v624
        %v629 = vrsqrt.pop %v576
        %v630 = vmul.f32 %v629, %v576
        %v631 = vmul.f32 %v630, %v629
        %v632 = vmul.f32 0.5, %v631
        %v633 = vsub.f32 1.5, %v632
        %v634 = vmul.f32 %v629, %v633
        %vm635 = vweird.f32 %v576
        %vm636 = vweird.f32 %v629
        %vm637 = vmor %vm635, %vm636
        %v638 = vsel %vm637, %v629, %v634
        %v639 = vrsqrt.pop %v577
        %v640 = vmul.f32 %v639, %v577
        %v641 = vmul.f32 %v640, %v639
        %v642 = vmul.f32 0.5, %v641
        %v643 = vsub.f32 1.5, %v642
        %v644 = vmul.f32 %v639, %v643
        %vm645 = vweird.f32 %v577
        %vm646 = vweird.f32 %v639
        %vm647 = vmor %vm645, %vm646
        %v648 = vsel %vm647, %v639, %v644
        %v649 = vrsqrt.pop %v578
        %v650 = vmul.f32 %v649, %v578
        %v651 = vmul.f32 %v650, %v649
        %v652 = vmul.f32 0.5, %v651
        %v653 = vsub.f32 1.5, %v652
        %v654 = vmul.f32 %v649, %v653
        %vm655 = vweird.f32 %v578
        %vm656 = vweird.f32 %v649
        %vm657 = vmor %vm655, %vm656
        %v658 = vsel %vm657, %v649, %v654
        %v659 = vld [vmem:[%s4] sm:$0xf]
        %v661 = vsel %vm436, %v588, 0
        %v664 = vsel %vm436, %v598, 0
        %v667 = vsel %vm436, %v608, 0
        %v670 = vsel %vm436, %v618, 0
        %v673 = vsel %vm436, %v628, 0
        %v676 = vsel %vm436, %v638, 0
        %v679 = vsel %vm436, %v648, 0
        %v682 = vsel %vm436, %v658, 0
        %v685 = vsel %vm461, %v659, 0
        %687 = vmatpush.msra.mxu0 0.0
        %688 = vmatpush.msra.mxu0 0.0
        %689 = vmatpush.msra.mxu0 0.0
        %690 = vmatpush.msra.mxu0 0.0
        %691 = vmatpush.msra.mxu0 0.0
        %692 = vmatpush.msra.mxu0 0.0
        %693 = vmatpush.msra.mxu0 0.0
        %694 = vmatpush.msra.mxu0 0.0
        %695 = vmatpush.msra.mxu0 0.0
        %696 = vmatpush.msra.mxu0 0.0
        %697 = vmatpush.msra.mxu0 0.0
        %698 = vmatpush.msra.mxu0 0.0
        %699 = vmatpush.msra.mxu0 0.0
        %700 = vmatpush.msra.mxu0 0.0
        %701 = vmatpush.msra.mxu0 0.0
        %702 = vmatpush.msra.mxu0 %v685
        %703 = vmatmul.f32.gmra.mxu0 %v661
        %v704 = vpop.f32.mrf.mxu0
        %v705 = vadd.f32 0.0, %v704
        %706 = vmatmul.f32.gmra.mxu0 %v664
        %v707 = vpop.f32.mrf.mxu0
        %v708 = vadd.f32 0.0, %v707
        %709 = vmatmul.f32.gmra.mxu0 %v667
        %v710 = vpop.f32.mrf.mxu0
        %v711 = vadd.f32 0.0, %v710
        %712 = vmatmul.f32.gmra.mxu0 %v670
        %v713 = vpop.f32.mrf.mxu0
        %v714 = vadd.f32 0.0, %v713
        %715 = vmatmul.f32.gmra.mxu0 %v673
        %v716 = vpop.f32.mrf.mxu0
        %v717 = vadd.f32 0.0, %v716
        %718 = vmatmul.f32.gmra.mxu0 %v676
        %v719 = vpop.f32.mrf.mxu0
        %v720 = vadd.f32 0.0, %v719
        %721 = vmatmul.f32.gmra.mxu0 %v679
        %v722 = vpop.f32.mrf.mxu0
        %v723 = vadd.f32 0.0, %v722
        %724 = vmatmul.f32.gmra.mxu0 %v682
        %v725 = vpop.f32.mrf.mxu0
        %v726 = vadd.f32 0.0, %v725
        %727 = vdwg.mxu0
        %v728 = vmul.f32 %v506, %v705
        %v729 = vmul.f32 %v507, %v708
        %v730 = vmul.f32 %v508, %v711
        %v731 = vmul.f32 %v509, %v714
        %v732 = vmul.f32 %v510, %v717
        %v733 = vmul.f32 %v511, %v720
        %v734 = vmul.f32 %v512, %v723
        %v735 = vmul.f32 %v513, %v726
        %v736 = vld [vmem:[%s5] sm:$0x1]
        %v738 = vperm.slane %v736, 0
        %v740 = vadd.f32 %v728, %v738
        %v741 = vadd.f32 %v729, %v738
        %v742 = vadd.f32 %v730, %v738
        %v743 = vadd.f32 %v731, %v738
        %v744 = vadd.f32 %v732, %v738
        %v745 = vadd.f32 %v733, %v738
        %v746 = vadd.f32 %v734, %v738
        %v747 = vadd.f32 %v735, %v738
        %v748 = vpack.c.bf16 %v740, %v740
        %v749 = vpack.c.bf16 %v741, %v741
        %v750 = vpack.c.bf16 %v742, %v742
        %v751 = vpack.c.bf16 %v743, %v743
        %v752 = vpack.c.bf16 %v744, %v744
        %v753 = vpack.c.bf16 %v745, %v745
        %v754 = vpack.c.bf16 %v746, %v746
        %v755 = vpack.c.bf16 %v747, %v747
        %756 = vst [vmem:[%s278] sm:$0xf] %v748
        %757 = vst [vmem:[%s278 + $0x4] sm:$0xf] %v749
        %758 = vst [vmem:[%s278 + $0x8] sm:$0xf] %v750
        %759 = vst [vmem:[%s278 + $0xc] sm:$0xf] %v751
        %760 = vst [vmem:[%s278 + $0x10] sm:$0xf] %v752
        %761 = vst [vmem:[%s278 + $0x14] sm:$0xf] %v753
        %762 = vst [vmem:[%s278 + $0x18] sm:$0xf] %v754
        %763 = vst [vmem:[%s278 + $0x1c] sm:$0xf] %v755
        %s764 = sand.u32 %s184, 1
        %s765 = scalar_lea.sflag [#allocation3], %s764
        %s766 = sand.u32 %s184, 1
        %s767 = smul.addr %s766, 32
        %s768 = scalar_lea.vmem [#allocation2], %s767
        // Predicated region
        $region45: #{tpu_custom_call.1} parent=43 // pred_check
          %p769 = pneg %p194
        $region46: #{tpu_custom_call.1} parent=43 // pred_check_branch
          %771 = sbr.rel (%p769) target = $region48
        $region47: #{tpu_custom_call.1} parent=43 // pred_region
          %s772 = smul.u32 8, %s26
          %774 = vsyncadd %s765, 0
          %s775 = smul.addr %s772, 4
          %s776 = sadd.s32 %s27, %s775
          %s777 = smul.addr %s25, 32
          %s778 = sadd.s32 %s776, %s777
          %s779 = smul.addr %s778, 4
          %s780 = scalar_lea.hbm %s6, %s779
          %s781 = sshll.u32 %s768, 4
          %s782 = int_to_ptr.vmem [resolvable:$true] %s781
          %s783 = sshll.u32 %s780, 4
          %s784 = int_to_ptr.hbm [resolvable:$true] %s783
          %789 = dma.vmem_to_hbm [thread:$0]  %s782, 512, %s784, %s765, 64, 256, 4
        $region48: #{tpu_custom_call.1} parent=43 // pred_fallthru
          _
      $region44: #{tpu_custom_call.1} parent=5 // pred_fallthru
        _
      %p790 = scmp.le.s32.totalorder 2, %s15
      // Predicated region
      $region49: #{tpu_custom_call.1} parent=5 // pred_check
        %p791 = pneg %p790
      $region50: #{tpu_custom_call.1} parent=5 // pred_check_branch
        %793 = sbr.rel (%p791) target = $region52
      $region51: #{tpu_custom_call.1} parent=5 // pred_region
        %s794 = ssub.s32 %s15, 2
        // Predicated region
        $region53: #{tpu_custom_call.1} parent=51 // pred_check
          %p795 = pneg %p200
        $region54: #{tpu_custom_call.1} parent=51 // pred_check_branch
          %797 = sbr.rel (%p795) target = $region56
        $region55: #{tpu_custom_call.1} parent=51 // pred_region
          %s798 = sand.u32 %s185, 1
          %s799 = scalar_lea.sflag [#allocation3], %s798
          %s800 = sand.u32 %s185, 1
          %s801 = smul.addr %s800, 32
          %s802 = scalar_lea.vmem [#allocation2], %s801
          %804 = dma.done %s799, 512
        $region56: #{tpu_custom_call.1} parent=51 // pred_fallthru
          _
      $region52: #{tpu_custom_call.1} parent=5 // pred_fallthru
        _
    $region6: #{tpu_custom_call.1} parent=1 // loop_footer
      %s19 = sadd.s32 1, %s15
    $region7: #{tpu_custom_call.1} parent=1 // loop_footer_branch
      %14 = sbr.rel target = $region3
    $region8: #{tpu_custom_call.1} parent=1 // loop_exit
      _
    %805 = vsyncpa [#allocation3], 1
    %s806 = scalar_lea.sflag [#allocation3], 1
    %807 = vsyncpa %s806, 1

</llo_original>
